<compile_context>
chip_gen: v6e
topology: v6e:2x2x1
jax: 0.10.0
libtpu: 0.0.40
codegen_flags: <defaults>
</compile_context>

<pallas_src>
import jax
import jax.numpy as jnp
import numpy as np
from jax.experimental import pallas as pl
from jax.experimental.pallas import tpu as pltpu  # noqa: F401  (TPU backend)

ALPHA = 0.2  # LeakyReLU negative slope


def _hga_kernel(x_ref, h_ref, ht_ref, w_ref, a_ref, o_ref):
    X = x_ref[...]            # (N, in_dim)  f32
    H = h_ref[...]            # (N, E)       f32
    HT = ht_ref[...]          # (E, N)       f32 (pre-transposed in wrapper)
    W = w_ref[...]            # (in_dim, out_dim)
    a = a_ref[...]            # (1, out_dim)

    # XW = X @ W   (MXU, canonical layout)
    XW = jnp.dot(X, W, preferred_element_type=jnp.float32)        # (N, out)

    # Degrees, produced directly in the layout they are consumed in
    # (no jnp.transpose of De needed).
    Dv = jnp.sum(H, axis=1, keepdims=True)                         # (N, 1) node deg
    De = jnp.sum(HT, axis=1, keepdims=True)                        # (E, 1) edge deg (== De^T)

    # Fold degree normalization into the tiny incidence operands before the
    # matmuls; reciprocals run on the EUP (approx vrcp), multiplies on VPU.
    HT_e = HT * pl.reciprocal(De + 1e-6, approx=True)              # (E, N)
    H_v = H * pl.reciprocal(Dv + 1e-6, approx=True)                # (N, E)

    # Both matmuls are canonical (M,K)@(K,N): no implicit H transpose.
    XW_H = jnp.dot(HT_e, XW, preferred_element_type=jnp.float32)   # (E, out)
    HXW = jnp.dot(H_v, XW_H, preferred_element_type=jnp.float32)   # (N, out)

    # e = leaky_relu(HXW * a)
    e = HXW * a
    e = jnp.where(e > 0, e, ALPHA * e)

    # softmax over the feature dim (dim=1); denominator reciprocal on EUP.
    m = jnp.max(e, axis=1, keepdims=True)
    ex = jnp.exp(e - m)
    attn = ex * pl.reciprocal(jnp.sum(ex, axis=1, keepdims=True), approx=True)

    # out = elu(attn * HXW)
    out = attn * HXW
    # NOTE: exp(out)-1 kept (expm1 lowering not relied upon); where() selects
    # so large positives are harmless.
    o_ref[...] = jnp.where(out > 0, out, jnp.exp(out) - 1.0)


def hypergraph_attention(X, H, W, a):
    N, in_dim = X.shape
    _, E = H.shape
    out_dim = W.shape[1]
    a2 = a.reshape(1, out_dim)
    HT = jnp.transpose(H)  # done once outside the kernel (free for XLA, tiny)

    full = lambda shape: pl.BlockSpec(shape, lambda: tuple(0 for _ in shape))

    return pl.pallas_call(
        _hga_kernel,
        out_shape=jax.ShapeDtypeStruct((N, out_dim), jnp.float32),
        grid_spec=pl.GridSpec(
            grid=(),
            in_specs=[
                full((N, in_dim)),
                full((N, E)),
                full((E, N)),
                full((in_dim, out_dim)),
                full((1, out_dim)),
            ],
            out_specs=full((N, out_dim)),
        ),
    )(X, H, HT, W, a2)


def _reference(X, H, W, a):
    XW = X @ W
    Dv = jnp.sum(H, axis=1, keepdims=True)
    De = jnp.sum(H, axis=0, keepdims=True)
    XW_H = (H.T @ XW) / (De.T + 1e-6)
    HXW = (H @ XW_H) / (Dv + 1e-6)
    e = HXW * a
    e = jnp.where(e > 0, e, ALPHA * e)
    attn = jax.nn.softmax(e, axis=1)
    out = attn * HXW
    return jnp.where(out > 0, out, jnp.exp(out) - 1.0)


if __name__ == "__main__":
    key = jax.random.PRNGKey(0)
    k1, k2, k3 = jax.random.split(key, 3)

    N, E, in_dim, out_dim = 32, 16, 16, 128

    # Inputs
    X = jax.random.normal(k1, (N, in_dim), dtype=jnp.float32)
    H = (jax.random.uniform(k2, (N, E)) > 0.5).astype(jnp.float32)  # incidence matrix

    # Parameters (deterministic init matching the PyTorch module)
    bound = float(np.sqrt(6.0 / (in_dim + out_dim)))  # xavier_uniform_
    W = jax.random.uniform(k3, (in_dim, out_dim), minval=-bound, maxval=bound,
                           dtype=jnp.float32)
    a = jnp.full((out_dim,), 0.1, dtype=jnp.float32)  # nn.init.constant_(a, 0.1)

    out = hypergraph_attention(X, H, W, a)
    out = jax.block_until_ready(out)

    ref = _reference(X, H, W, a)
    # Tolerance accounts for pl.reciprocal(approx=True) (~2^-14 rel error,
    # compounded across degree norms + softmax denominator).
    np.testing.assert_allclose(np.asarray(out), np.asarray(ref),
                               rtol=3e-3, atol=3e-4)

    print("KERNEL_OK")
</pallas_src>

<mosaic_0001>
module attributes {stable_mosaic.version = 11 : i64} {
  func.func @_hga_kernel(%arg0: memref<32x16xf32, #tpu.memory_space<vmem>>, %arg1: memref<32x16xf32, #tpu.memory_space<vmem>>, %arg2: memref<16x32xf32, #tpu.memory_space<vmem>>, %arg3: memref<16x128xf32, #tpu.memory_space<vmem>>, %arg4: memref<1x128xf32, #tpu.memory_space<vmem>>, %arg5: memref<32x128xf32, #tpu.memory_space<vmem>>) attributes {dimension_semantics = [], scalar_prefetch = 0 : i64, scratch_operands = 0 : i64, tpu.core_type = #tpu.core_type<tc>} {
    %c0 = arith.constant 0 : index
    %c0_0 = arith.constant 0 : index
    %0 = vector.load %arg0[%c0, %c0_0] : memref<32x16xf32, #tpu.memory_space<vmem>>, vector<32x16xf32>
    %c0_1 = arith.constant 0 : index
    %c0_2 = arith.constant 0 : index
    %1 = vector.load %arg1[%c0_1, %c0_2] : memref<32x16xf32, #tpu.memory_space<vmem>>, vector<32x16xf32>
    %c0_3 = arith.constant 0 : index
    %c0_4 = arith.constant 0 : index
    %2 = vector.load %arg2[%c0_3, %c0_4] : memref<16x32xf32, #tpu.memory_space<vmem>>, vector<16x32xf32>
    %c0_5 = arith.constant 0 : index
    %c0_6 = arith.constant 0 : index
    %3 = vector.load %arg3[%c0_5, %c0_6] : memref<16x128xf32, #tpu.memory_space<vmem>>, vector<16x128xf32>
    %c0_7 = arith.constant 0 : index
    %c0_8 = arith.constant 0 : index
    %4 = vector.load %arg4[%c0_7, %c0_8] : memref<1x128xf32, #tpu.memory_space<vmem>>, vector<1x128xf32>
    %cst = arith.constant dense<0.000000e+00> : vector<32x128xf32>
    %5 = tpu.matmul %0, %3, %cst {dimension_numbers = #tpu.dot_dimension_numbers<[1], [0], [0], [1], [0, 0, 1, 1], [], []>} : vector<32x16xf32>, vector<16x128xf32>, vector<32x128xf32> -> vector<32x128xf32>
    %cst_9 = arith.constant dense<0.000000e+00> : vector<32xf32>
    %6 = vector.multi_reduction <add>, %1, %cst_9 [1] : vector<32x16xf32> to vector<32xf32>
    %7 = vector.shape_cast %6 : vector<32xf32> to vector<32x1xf32>
    %cst_10 = arith.constant dense<0.000000e+00> : vector<16xf32>
    %8 = vector.multi_reduction <add>, %2, %cst_10 [1] : vector<16x32xf32> to vector<16xf32>
    %9 = vector.shape_cast %8 : vector<16xf32> to vector<16x1xf32>
    %cst_11 = arith.constant 9.99999997E-7 : f32
    %10 = vector.broadcast %cst_11 : f32 to vector<16x1xf32>
    %11 = arith.addf %9, %10 : vector<16x1xf32>
    %12 = tpu.reciprocal %11 {approx = true} : vector<16x1xf32> -> vector<16x1xf32>
    %13 = vector.broadcast %12 : vector<16x1xf32> to vector<16x32xf32>
    %14 = arith.mulf %2, %13 : vector<16x32xf32>
    %cst_12 = arith.constant 9.99999997E-7 : f32
    %15 = vector.broadcast %cst_12 : f32 to vector<32x1xf32>
    %16 = arith.addf %7, %15 : vector<32x1xf32>
    %17 = tpu.reciprocal %16 {approx = true} : vector<32x1xf32> -> vector<32x1xf32>
    %18 = vector.broadcast %17 : vector<32x1xf32> to vector<32x16xf32>
    %19 = arith.mulf %1, %18 : vector<32x16xf32>
    %cst_13 = arith.constant dense<0.000000e+00> : vector<16x128xf32>
    %20 = tpu.matmul %14, %5, %cst_13 {dimension_numbers = #tpu.dot_dimension_numbers<[1], [0], [0], [1], [0, 0, 1, 1], [], []>} : vector<16x32xf32>, vector<32x128xf32>, vector<16x128xf32> -> vector<16x128xf32>
    %cst_14 = arith.constant dense<0.000000e+00> : vector<32x128xf32>
    %21 = tpu.matmul %19, %20, %cst_14 {dimension_numbers = #tpu.dot_dimension_numbers<[1], [0], [0], [1], [0, 0, 1, 1], [], []>} : vector<32x16xf32>, vector<16x128xf32>, vector<32x128xf32> -> vector<32x128xf32>
    %22 = vector.broadcast %4 : vector<1x128xf32> to vector<32x128xf32>
    %23 = arith.mulf %21, %22 : vector<32x128xf32>
    %cst_15 = arith.constant 0.000000e+00 : f32
    %24 = vector.broadcast %cst_15 : f32 to vector<32x128xf32>
    %25 = arith.cmpf ogt, %23, %24 : vector<32x128xf32>
    %cst_16 = arith.constant 2.000000e-01 : f32
    %26 = vector.broadcast %cst_16 : f32 to vector<32x128xf32>
    %27 = arith.mulf %26, %23 : vector<32x128xf32>
    %28 = arith.select %25, %23, %27 : vector<32x128xi1>, vector<32x128xf32>
    %cst_17 = arith.constant dense<0xFF800000> : vector<32xf32>
    %29 = vector.multi_reduction <maximumf>, %28, %cst_17 [1] : vector<32x128xf32> to vector<32xf32>
    %30 = vector.shape_cast %29 : vector<32xf32> to vector<32x1xf32>
    %31 = vector.broadcast %30 : vector<32x1xf32> to vector<32x128xf32>
    %32 = arith.subf %28, %31 : vector<32x128xf32>
    %33 = math.exp %32 : vector<32x128xf32>
    %cst_18 = arith.constant dense<0.000000e+00> : vector<32xf32>
    %34 = vector.multi_reduction <add>, %33, %cst_18 [1] : vector<32x128xf32> to vector<32xf32>
    %35 = vector.shape_cast %34 : vector<32xf32> to vector<32x1xf32>
    %36 = tpu.reciprocal %35 {approx = true} : vector<32x1xf32> -> vector<32x1xf32>
    %37 = vector.broadcast %36 : vector<32x1xf32> to vector<32x128xf32>
    %38 = arith.mulf %33, %37 : vector<32x128xf32>
    %39 = arith.mulf %38, %21 : vector<32x128xf32>
    %cst_19 = arith.constant 0.000000e+00 : f32
    %40 = vector.broadcast %cst_19 : f32 to vector<32x128xf32>
    %41 = arith.cmpf ogt, %39, %40 : vector<32x128xf32>
    %42 = math.exp %39 : vector<32x128xf32>
    %cst_20 = arith.constant 1.000000e+00 : f32
    %43 = vector.broadcast %cst_20 : f32 to vector<32x128xf32>
    %44 = arith.subf %42, %43 : vector<32x128xf32>
    %45 = arith.select %41, %39, %44 : vector<32x128xi1>, vector<32x128xf32>
    %c0_21 = arith.constant 0 : index
    %c0_22 = arith.constant 0 : index
    %46 = vector.load %arg5[%c0_21, %c0_22] : memref<32x128xf32, #tpu.memory_space<vmem>>, vector<32x128xf32>
    tpu.vector_store %arg5[%c0_21, %c0_22], %45 {strides = array<i32>} : memref<32x128xf32, #tpu.memory_space<vmem>>, vector<32x128xf32>,
    return
  }
}

</mosaic_0001>

<llo_original>
// kernel: tpu_custom_call.1
$region0: #{tpu_custom_call.1}
  #allocation0 [shape = 'u32[]', space=smem, size = 0x4, offset = 0x4, fixed_abs, tag = 'smem constant byte address 0x4 - core index']
  #allocation1 [shape = 'u32[144,128]{1,0:T(1,128)}', space=vmem, size = 0x12000, scoped, tag = 'internal scratch']
  %s0 = inlined_call_operand.vmem [shape: f32[32,16], index: 0, kind: input, shape index: {}]
  %s1 = inlined_call_operand.vmem [shape: f32[32,16], index: 1, kind: input, shape index: {}]
  %s2 = inlined_call_operand.vmem [shape: f32[16,32], index: 2, kind: input, shape index: {}]
  %s3 = inlined_call_operand.vmem [shape: f32[16,128], index: 3, kind: input, shape index: {}]
  %s4 = inlined_call_operand.vmem [shape: f32[1,128], index: 4, kind: input, shape index: {}]
  %s5 = inlined_call_operand.hbm [shape: f32[32,128], index: 5, kind: output, shape index: {}]
  %s6 = sld [smem:[#allocation0]]
  $region30: #{tpu_custom_call.1} parent=0
    _
  %s8 = ssub.s32 1, %s6
  %s9 = scalar_select 0, %s8, %s6
  $region1: #{tpu_custom_call.1} parent=0
    #allocation2 [shape = 'u8[16384]{0}', space=vmem, size = 0x4000, scoped, tag = 'output window, operand 0, single buffered']
    #allocation3 [shape = 's32[1]{0}', space=sflag, size = 0x4, scoped, tag = 'scoped memory for tpu_custom_call.1']
    %10 = vsyncpa [#allocation3], 0
    // Predicated region
    $region2: #{tpu_custom_call.1} parent=1 // pred_check
      _
    $region3: #{tpu_custom_call.1} parent=1 // pred_check_branch
      %12 = sbr.rel (0) target = $region5
    $region4: #{tpu_custom_call.1} parent=1 // pred_region
      _
    $region5: #{tpu_custom_call.1} parent=1 // pred_fallthru
      _
    // Predicated region
    $region6: #{tpu_custom_call.1} parent=1 // pred_check
      _
    $region7: #{tpu_custom_call.1} parent=1 // pred_check_branch
      %14 = sbr.rel (0) target = $region9
    $region8: #{tpu_custom_call.1} parent=1 // pred_region
      _
    $region9: #{tpu_custom_call.1} parent=1 // pred_fallthru
      _
    // Predicated region
    $region10: #{tpu_custom_call.1} parent=1 // pred_check
      _
    $region11: #{tpu_custom_call.1} parent=1 // pred_check_branch
      %16 = sbr.rel (0) target = $region13
    $region12: #{tpu_custom_call.1} parent=1 // pred_region
      _
    $region13: #{tpu_custom_call.1} parent=1 // pred_fallthru
      _
    // Predicated region
    $region14: #{tpu_custom_call.1} parent=1 // pred_check
      _
    $region15: #{tpu_custom_call.1} parent=1 // pred_check_branch
      %18 = sbr.rel (0) target = $region17
    $region16: #{tpu_custom_call.1} parent=1 // pred_region
      _
    $region17: #{tpu_custom_call.1} parent=1 // pred_fallthru
      _
    // Predicated region
    $region18: #{tpu_custom_call.1} parent=1 // pred_check
      _
    $region19: #{tpu_custom_call.1} parent=1 // pred_check_branch
      %20 = sbr.rel (0) target = $region21
    $region20: #{tpu_custom_call.1} parent=1 // pred_region
      _
    $region21: #{tpu_custom_call.1} parent=1 // pred_fallthru
      _
    %v21 = vld [vmem:[%s0] sm:$0xff]
    %v22 = vld [vmem:[%s0 + $0x8] sm:$0xff]
    %v23 = vld [vmem:[%s0 + $0x10] sm:$0xff]
    %v24 = vld [vmem:[%s0 + $0x18] sm:$0xff]
    %v25 = vld [vmem:[%s1] sm:$0xff]
    %v26 = vld [vmem:[%s1 + $0x8] sm:$0xff]
    %v27 = vld [vmem:[%s1 + $0x10] sm:$0xff]
    %v28 = vld [vmem:[%s1 + $0x18] sm:$0xff]
    %v29 = vld [vmem:[%s2] sm:$0xff]
    %v30 = vld [vmem:[%s2 + $0x8] sm:$0xff]
    %v31 = vld [vmem:[%s3] sm:$0xff]
    %v32 = vld [vmem:[%s3 + $0x8] sm:$0xff]
    %v33 = vld [vmem:[%s4] sm:$0x1]
    %vm34 = vcmask 130048
    %v36 = vsel %vm34, %v21, 0
    %v39 = vsel %vm34, %v22, 0
    %v42 = vsel %vm34, %v23, 0
    %v45 = vsel %vm34, %v24, 0
    %47 = vmatprep.subr.mxu0 0.0
    %48 = vmatpush1.msra.mxu0 0.0
    %49 = vmatprep.subr.mxu0 0.0
    %50 = vmatpush1.msra.mxu0 0.0
    %51 = vmatprep.subr.mxu0 0.0
    %52 = vmatpush1.msra.mxu0 0.0
    %53 = vmatprep.subr.mxu0 0.0
    %54 = vmatpush1.msra.mxu0 0.0
    %55 = vmatprep.subr.mxu0 0.0
    %56 = vmatpush1.msra.mxu0 0.0
    %57 = vmatprep.subr.mxu0 0.0
    %58 = vmatpush1.msra.mxu0 0.0
    %59 = vmatprep.subr.mxu0 0.0
    %60 = vmatpush1.msra.mxu0 0.0
    %61 = vmatprep.subr.mxu0 0.0
    %62 = vmatpush1.msra.mxu0 0.0
    %63 = vmatprep.subr.mxu0 0.0
    %64 = vmatpush1.msra.mxu0 0.0
    %65 = vmatprep.subr.mxu0 0.0
    %66 = vmatpush1.msra.mxu0 0.0
    %67 = vmatprep.subr.mxu0 0.0
    %68 = vmatpush1.msra.mxu0 0.0
    %69 = vmatprep.subr.mxu0 0.0
    %70 = vmatpush1.msra.mxu0 0.0
    %71 = vmatprep.subr.mxu0 0.0
    %72 = vmatpush1.msra.mxu0 0.0
    %73 = vmatprep.subr.mxu0 0.0
    %74 = vmatpush1.msra.mxu0 0.0
    %75 = vmatprep.subr.mxu0 0.0
    %76 = vmatpush1.msra.mxu0 %v32
    %77 = vmatprep.subr.mxu0 0.0
    %78 = vmatpush1.msra.mxu0 %v31
    %79 = vmatprep.subr.mxu0 0.0
    %80 = vmatpush2.msra.mxu0 0.0
    %81 = vmatprep.subr.mxu0 0.0
    %82 = vmatpush2.msra.mxu0 0.0
    %83 = vmatprep.subr.mxu0 0.0
    %84 = vmatpush2.msra.mxu0 0.0
    %85 = vmatprep.subr.mxu0 0.0
    %86 = vmatpush2.msra.mxu0 0.0
    %87 = vmatprep.subr.mxu0 0.0
    %88 = vmatpush2.msra.mxu0 0.0
    %89 = vmatprep.subr.mxu0 0.0
    %90 = vmatpush2.msra.mxu0 0.0
    %91 = vmatprep.subr.mxu0 0.0
    %92 = vmatpush2.msra.mxu0 0.0
    %93 = vmatprep.subr.mxu0 0.0
    %94 = vmatpush2.msra.mxu0 0.0
    %95 = vmatprep.subr.mxu0 0.0
    %96 = vmatpush2.msra.mxu0 0.0
    %97 = vmatprep.subr.mxu0 0.0
    %98 = vmatpush2.msra.mxu0 0.0
    %99 = vmatprep.subr.mxu0 0.0
    %100 = vmatpush2.msra.mxu0 0.0
    %101 = vmatprep.subr.mxu0 0.0
    %102 = vmatpush2.msra.mxu0 0.0
    %103 = vmatprep.subr.mxu0 0.0
    %104 = vmatpush2.msra.mxu0 0.0
    %105 = vmatprep.subr.mxu0 0.0
    %106 = vmatpush2.msra.mxu0 0.0
    %107 = vmatprep.subr.mxu0 0.0
    %108 = vmatpush2.msra.mxu0 0.0
    %109 = vmatprep.subr.mxu0 0.0
    %110 = vmatpush2.msra.mxu0 0.0
    %111 = vmatprep.mubr.f32.mxu0 0.0
    %112 = vmatmul.mubr.f32.gmra.mxu0 %v36
    %v113 = vpop.f32.mrf.mxu0
    %v114 = vadd.f32 0.0, %v113
    %v115 = vpop.f32.mrf.mxu0
    %116 = vmatprep.mubr.f32.mxu0 0.0
    %117 = vmatmul.mubr.f32.gmra.mxu0 %v39
    %v118 = vpop.f32.mrf.mxu0
    %v119 = vadd.f32 0.0, %v118
    %v120 = vpop.f32.mrf.mxu0
    %121 = vmatprep.mubr.f32.mxu0 0.0
    %122 = vmatmul.mubr.f32.gmra.mxu0 %v42
    %v123 = vpop.f32.mrf.mxu0
    %v124 = vadd.f32 0.0, %v123
    %v125 = vpop.f32.mrf.mxu0
    %126 = vmatprep.mubr.f32.mxu0 0.0
    %127 = vmatmul.mubr.f32.gmra.mxu0 %v45
    %v128 = vpop.f32.mrf.mxu0
    %v129 = vadd.f32 0.0, %v128
    %v130 = vpop.f32.mrf.mxu0
    %131 = vdwg.mxu0
    %v132 = vsel %vm34, %v25, 0.0
    %133 = vadd.xlane.f32.xlu0 %v132
    %v134 = vpop.xlane.xlu0 %133
    %v135 = vsel %vm34, %v26, 0.0
    %136 = vadd.xlane.f32.xlu0 %v135
    %v137 = vpop.xlane.xlu0 %136
    %v138 = vsel %vm34, %v27, 0.0
    %139 = vadd.xlane.f32.xlu0 %v138
    %v140 = vpop.xlane.xlu0 %139
    %v141 = vsel %vm34, %v28, 0.0
    %142 = vadd.xlane.f32.xlu0 %v141
    %v143 = vpop.xlane.xlu0 %142
    %vm144 = vcmask 261120
    %v145 = vsel %vm144, %v29, 0.0
    %146 = vadd.xlane.f32.xlu0 %v145
    %v147 = vpop.xlane.xlu0 %146
    %v148 = vsel %vm144, %v30, 0.0
    %149 = vadd.xlane.f32.xlu0 %v148
    %v150 = vpop.xlane.xlu0 %149
    %v151 = vadd.f32 %v147, 1e-06
    %v152 = vadd.f32 %v150, 1e-06
    %v153 = vrcp.pop %v151
    %v154 = vrcp.pop %v152
    %v155 = vmul.f32 %v29, %v153
    %v156 = vmul.f32 %v30, %v154
    %v157 = vadd.f32 %v134, 1e-06
    %v158 = vadd.f32 %v137, 1e-06
    %v159 = vadd.f32 %v140, 1e-06
    %v160 = vadd.f32 %v143, 1e-06
    %v161 = vrcp.pop %v157
    %v162 = vrcp.pop %v158
    %v163 = vrcp.pop %v159
    %v164 = vrcp.pop %v160
    %v165 = vmul.f32 %v25, %v161
    %v166 = vmul.f32 %v26, %v162
    %v167 = vmul.f32 %v27, %v163
    %v168 = vmul.f32 %v28, %v164
    %v170 = vsel %vm144, %v155, 0
    %v173 = vsel %vm144, %v156, 0
    %175 = vmatprep.subr.mxu0 0.0
    %176 = vmatpush1.msra.mxu0 0.0
    %177 = vmatprep.subr.mxu0 0.0
    %178 = vmatpush1.msra.mxu0 0.0
    %179 = vmatprep.subr.mxu0 0.0
    %180 = vmatpush1.msra.mxu0 0.0
    %181 = vmatprep.subr.mxu0 0.0
    %182 = vmatpush1.msra.mxu0 0.0
    %183 = vmatprep.subr.mxu0 0.0
    %184 = vmatpush1.msra.mxu0 0.0
    %185 = vmatprep.subr.mxu0 0.0
    %186 = vmatpush1.msra.mxu0 0.0
    %187 = vmatprep.subr.mxu0 0.0
    %188 = vmatpush1.msra.mxu0 0.0
    %189 = vmatprep.subr.mxu0 0.0
    %190 = vmatpush1.msra.mxu0 0.0
    %191 = vmatprep.subr.mxu0 0.0
    %192 = vmatpush1.msra.mxu0 0.0
    %193 = vmatprep.subr.mxu0 0.0
    %194 = vmatpush1.msra.mxu0 0.0
    %195 = vmatprep.subr.mxu0 0.0
    %196 = vmatpush1.msra.mxu0 0.0
    %197 = vmatprep.subr.mxu0 0.0
    %198 = vmatpush1.msra.mxu0 0.0
    %199 = vmatprep.subr.mxu0 0.0
    %200 = vmatpush1.msra.mxu0 %v129
    %201 = vmatprep.subr.mxu0 0.0
    %202 = vmatpush1.msra.mxu0 %v124
    %203 = vmatprep.subr.mxu0 0.0
    %204 = vmatpush1.msra.mxu0 %v119
    %205 = vmatprep.subr.mxu0 0.0
    %206 = vmatpush1.msra.mxu0 %v114
    %207 = vmatprep.subr.mxu0 0.0
    %208 = vmatpush2.msra.mxu0 0.0
    %209 = vmatprep.subr.mxu0 0.0
    %210 = vmatpush2.msra.mxu0 0.0
    %211 = vmatprep.subr.mxu0 0.0
    %212 = vmatpush2.msra.mxu0 0.0
    %213 = vmatprep.subr.mxu0 0.0
    %214 = vmatpush2.msra.mxu0 0.0
    %215 = vmatprep.subr.mxu0 0.0
    %216 = vmatpush2.msra.mxu0 0.0
    %217 = vmatprep.subr.mxu0 0.0
    %218 = vmatpush2.msra.mxu0 0.0
    %219 = vmatprep.subr.mxu0 0.0
    %220 = vmatpush2.msra.mxu0 0.0
    %221 = vmatprep.subr.mxu0 0.0
    %222 = vmatpush2.msra.mxu0 0.0
    %223 = vmatprep.subr.mxu0 0.0
    %224 = vmatpush2.msra.mxu0 0.0
    %225 = vmatprep.subr.mxu0 0.0
    %226 = vmatpush2.msra.mxu0 0.0
    %227 = vmatprep.subr.mxu0 0.0
    %228 = vmatpush2.msra.mxu0 0.0
    %229 = vmatprep.subr.mxu0 0.0
    %230 = vmatpush2.msra.mxu0 0.0
    %231 = vmatprep.subr.mxu0 0.0
    %232 = vmatpush2.msra.mxu0 0.0
    %233 = vmatprep.subr.mxu0 0.0
    %234 = vmatpush2.msra.mxu0 0.0
    %235 = vmatprep.subr.mxu0 0.0
    %236 = vmatpush2.msra.mxu0 0.0
    %237 = vmatprep.subr.mxu0 0.0
    %238 = vmatpush2.msra.mxu0 0.0
    %239 = vmatprep.mubr.f32.mxu0 0.0
    %240 = vmatmul.mubr.f32.gmra.mxu0 %v170
    %v241 = vpop.f32.mrf.mxu0
    %v242 = vadd.f32 0.0, %v241
    %v243 = vpop.f32.mrf.mxu0
    %244 = vmatprep.mubr.f32.mxu0 0.0
    %245 = vmatmul.mubr.f32.gmra.mxu0 %v173
    %v246 = vpop.f32.mrf.mxu0
    %v247 = vadd.f32 0.0, %v246
    %v248 = vpop.f32.mrf.mxu0
    %249 = vdwg.mxu0
    %v251 = vsel %vm34, %v165, 0
    %v254 = vsel %vm34, %v166, 0
    %v257 = vsel %vm34, %v167, 0
    %v260 = vsel %vm34, %v168, 0
    %262 = vmatprep.subr.mxu0 0.0
    %263 = vmatpush1.msra.mxu0 0.0
    %264 = vmatprep.subr.mxu0 0.0
    %265 = vmatpush1.msra.mxu0 0.0
    %266 = vmatprep.subr.mxu0 0.0
    %267 = vmatpush1.msra.mxu0 0.0
    %268 = vmatprep.subr.mxu0 0.0
    %269 = vmatpush1.msra.mxu0 0.0
    %270 = vmatprep.subr.mxu0 0.0
    %271 = vmatpush1.msra.mxu0 0.0
    %272 = vmatprep.subr.mxu0 0.0
    %273 = vmatpush1.msra.mxu0 0.0
    %274 = vmatprep.subr.mxu0 0.0
    %275 = vmatpush1.msra.mxu0 0.0
    %276 = vmatprep.subr.mxu0 0.0
    %277 = vmatpush1.msra.mxu0 0.0
    %278 = vmatprep.subr.mxu0 0.0
    %279 = vmatpush1.msra.mxu0 0.0
    %280 = vmatprep.subr.mxu0 0.0
    %281 = vmatpush1.msra.mxu0 0.0
    %282 = vmatprep.subr.mxu0 0.0
    %283 = vmatpush1.msra.mxu0 0.0
    %284 = vmatprep.subr.mxu0 0.0
    %285 = vmatpush1.msra.mxu0 0.0
    %286 = vmatprep.subr.mxu0 0.0
    %287 = vmatpush1.msra.mxu0 0.0
    %288 = vmatprep.subr.mxu0 0.0
    %289 = vmatpush1.msra.mxu0 0.0
    %290 = vmatprep.subr.mxu0 0.0
    %291 = vmatpush1.msra.mxu0 %v247
    %292 = vmatprep.subr.mxu0 0.0
    %293 = vmatpush1.msra.mxu0 %v242
    %294 = vmatprep.subr.mxu0 0.0
    %295 = vmatpush2.msra.mxu0 0.0
    %296 = vmatprep.subr.mxu0 0.0
    %297 = vmatpush2.msra.mxu0 0.0
    %298 = vmatprep.subr.mxu0 0.0
    %299 = vmatpush2.msra.mxu0 0.0
    %300 = vmatprep.subr.mxu0 0.0
    %301 = vmatpush2.msra.mxu0 0.0
    %302 = vmatprep.subr.mxu0 0.0
    %303 = vmatpush2.msra.mxu0 0.0
    %304 = vmatprep.subr.mxu0 0.0
    %305 = vmatpush2.msra.mxu0 0.0
    %306 = vmatprep.subr.mxu0 0.0
    %307 = vmatpush2.msra.mxu0 0.0
    %308 = vmatprep.subr.mxu0 0.0
    %309 = vmatpush2.msra.mxu0 0.0
    %310 = vmatprep.subr.mxu0 0.0
    %311 = vmatpush2.msra.mxu0 0.0
    %312 = vmatprep.subr.mxu0 0.0
    %313 = vmatpush2.msra.mxu0 0.0
    %314 = vmatprep.subr.mxu0 0.0
    %315 = vmatpush2.msra.mxu0 0.0
    %316 = vmatprep.subr.mxu0 0.0
    %317 = vmatpush2.msra.mxu0 0.0
    %318 = vmatprep.subr.mxu0 0.0
    %319 = vmatpush2.msra.mxu0 0.0
    %320 = vmatprep.subr.mxu0 0.0
    %321 = vmatpush2.msra.mxu0 0.0
    %322 = vmatprep.subr.mxu0 0.0
    %323 = vmatpush2.msra.mxu0 0.0
    %324 = vmatprep.subr.mxu0 0.0
    %325 = vmatpush2.msra.mxu0 0.0
    %326 = vmatprep.mubr.f32.mxu0 0.0
    %327 = vmatmul.mubr.f32.gmra.mxu0 %v251
    %v328 = vpop.f32.mrf.mxu0
    %v329 = vadd.f32 0.0, %v328
    %v330 = vpop.f32.mrf.mxu0
    %331 = vmatprep.mubr.f32.mxu0 0.0
    %332 = vmatmul.mubr.f32.gmra.mxu0 %v254
    %v333 = vpop.f32.mrf.mxu0
    %v334 = vadd.f32 0.0, %v333
    %v335 = vpop.f32.mrf.mxu0
    %336 = vmatprep.mubr.f32.mxu0 0.0
    %337 = vmatmul.mubr.f32.gmra.mxu0 %v257
    %v338 = vpop.f32.mrf.mxu0
    %v339 = vadd.f32 0.0, %v338
    %v340 = vpop.f32.mrf.mxu0
    %341 = vmatprep.mubr.f32.mxu0 0.0
    %342 = vmatmul.mubr.f32.gmra.mxu0 %v260
    %v343 = vpop.f32.mrf.mxu0
    %v344 = vadd.f32 0.0, %v343
    %v345 = vpop.f32.mrf.mxu0
    %346 = vdwg.mxu0
    %v348 = vlaneseq
    %v349 = vshrl.u32 %v348, 7
    %v350 = vsub.s32 0, %v349
    %v351 = vrot.slane %v33, %v350
    %v353 = vmul.f32 %v329, %v351
    %v354 = vmul.f32 %v334, %v351
    %v355 = vmul.f32 %v339, %v351
    %v356 = vmul.f32 %v344, %v351
    %vm357 = vcmp.gt.f32.partialorder %v353, 0.0
    %vm358 = vcmp.gt.f32.partialorder %v354, 0.0
    %vm359 = vcmp.gt.f32.partialorder %v355, 0.0
    %vm360 = vcmp.gt.f32.partialorder %v356, 0.0
    %v361 = vmul.f32 %v353, 0.2
    %v362 = vmul.f32 %v354, 0.2
    %v363 = vmul.f32 %v355, 0.2
    %v364 = vmul.f32 %v356, 0.2
    %v365 = vsel %vm357, %v353, %v361
    %v366 = vsel %vm358, %v354, %v362
    %v367 = vsel %vm359, %v355, %v363
    %v368 = vsel %vm360, %v356, %v364
    %369 = vmax.xlane.f32.xlu0 %v365
    %v370 = vpop.xlane.xlu0 %369
    %371 = vmax.xlane.f32.xlu0 %v366
    %v372 = vpop.xlane.xlu0 %371
    %373 = vmax.xlane.f32.xlu0 %v367
    %v374 = vpop.xlane.xlu0 %373
    %375 = vmax.xlane.f32.xlu0 %v368
    %v376 = vpop.xlane.xlu0 %375
    %v377 = vsub.f32 %v365, %v370
    %v378 = vsub.f32 %v366, %v372
    %v379 = vsub.f32 %v367, %v374
    %v380 = vsub.f32 %v368, %v376
    %v381 = vmul.f32 %v377, 1.442695
    %v382 = vpow.pop %v381
    %v383 = vmul.f32 %v378, 1.442695
    %v384 = vpow.pop %v383
    %v385 = vmul.f32 %v379, 1.442695
    %v386 = vpow.pop %v385
    %v387 = vmul.f32 %v380, 1.442695
    %v388 = vpow.pop %v387
    %389 = vadd.xlane.f32.xlu0 %v382
    %v390 = vpop.xlane.xlu0 %389
    %391 = vadd.xlane.f32.xlu0 %v384
    %v392 = vpop.xlane.xlu0 %391
    %393 = vadd.xlane.f32.xlu0 %v386
    %v394 = vpop.xlane.xlu0 %393
    %395 = vadd.xlane.f32.xlu0 %v388
    %v396 = vpop.xlane.xlu0 %395
    %v397 = vrcp.pop %v390
    %v398 = vrcp.pop %v392
    %v399 = vrcp.pop %v394
    %v400 = vrcp.pop %v396
    %v401 = vmul.f32 %v382, %v397
    %v402 = vmul.f32 %v384, %v398
    %v403 = vmul.f32 %v386, %v399
    %v404 = vmul.f32 %v388, %v400
    %v405 = vmul.f32 %v401, %v329
    %v406 = vmul.f32 %v402, %v334
    %v407 = vmul.f32 %v403, %v339
    %v408 = vmul.f32 %v404, %v344
    %vm409 = vcmp.gt.f32.partialorder %v405, 0.0
    %vm410 = vcmp.gt.f32.partialorder %v406, 0.0
    %vm411 = vcmp.gt.f32.partialorder %v407, 0.0
    %vm412 = vcmp.gt.f32.partialorder %v408, 0.0
    %v413 = vmul.f32 %v405, 1.442695
    %v414 = vpow.pop %v413
    %v415 = vmul.f32 %v406, 1.442695
    %v416 = vpow.pop %v415
    %v417 = vmul.f32 %v407, 1.442695
    %v418 = vpow.pop %v417
    %v419 = vmul.f32 %v408, 1.442695
    %v420 = vpow.pop %v419
    %v421 = vsub.f32 %v414, 1.0
    %v422 = vsub.f32 %v416, 1.0
    %v423 = vsub.f32 %v418, 1.0
    %v424 = vsub.f32 %v420, 1.0
    %v425 = vsel %vm409, %v405, %v421
    %v426 = vsel %vm410, %v406, %v422
    %v427 = vsel %vm411, %v407, %v423
    %v428 = vsel %vm412, %v408, %v424
    %429 = vst [vmem:[#allocation2] sm:$0xff] %v425
    %430 = vst [vmem:[#allocation2 + $0x8] sm:$0xff] %v426
    %431 = vst [vmem:[#allocation2 + $0x10] sm:$0xff] %v427
    %432 = vst [vmem:[#allocation2 + $0x18] sm:$0xff] %v428
    // Predicated region
    $region22: #{tpu_custom_call.1} parent=1 // pred_check
      _
    $region23: #{tpu_custom_call.1} parent=1 // pred_check_branch
      %434 = sbr.rel (0) target = $region25
    $region24: #{tpu_custom_call.1} parent=1 // pred_region
      %s436 = ssub.s32 512, 512
      %437 = vsyncadd [#allocation3], %s436
      %s438 = sshll.u32 [#allocation2], 4
      %s439 = int_to_ptr.vmem [resolvable:$true] %s438
      %444 = dma.vmem_to_hbm [thread:$0]  %s439, 512, %s5, [#allocation3], 128, 128, 8
    $region25: #{tpu_custom_call.1} parent=1 // pred_fallthru
      _
    // Predicated region
    $region26: #{tpu_custom_call.1} parent=1 // pred_check
      _
    $region27: #{tpu_custom_call.1} parent=1 // pred_check_branch
      %446 = sbr.rel (0) target = $region29
    $region28: #{tpu_custom_call.1} parent=1 // pred_region
      %447 = dma.done [#allocation3], 512
    $region29: #{tpu_custom_call.1} parent=1 // pred_fallthru
      _
    %448 = vsyncpa [#allocation3], 1

</llo_original>
